<compile_context>
chip_gen: v6e
topology: v6e:2x2x1
jax: 0.10.0
libtpu: 0.0.40
codegen_flags: <defaults>
</compile_context>

<pallas_src>
import jax
import jax.numpy as jnp
from jax.experimental import pallas as pl
from jax.experimental.pallas import tpu as pltpu


def _multi_linear_kernel(f_ref, g_ref, o_ref):
    # f_ref: (TB, F)  g_ref: (TB, C)  o_ref: (TB, C*F)
    f = f_ref[...].astype(jnp.float32)        # (TB, F)
    g = g_ref[...].astype(jnp.float32)        # (TB, C)
    # Per-batch outer product on the VPU: out[b, c, j] = g[b, c] * f[b, j].
    # Built once per grid step (no per-C inner loop -> single broadcast).
    outer = g[:, :, None] * f[:, None, :]     # (TB, C, F)
    # Collapse (C, F) -> C*F in-register and do one lane-dense store.
    o_ref[...] = outer.reshape(o_ref.shape).astype(o_ref.dtype)


def multi_linear_map(f: jax.Array, g: jax.Array, *,
                     max_batch_tile: int | None = None,
                     target_tile_bytes: int = 4 << 20) -> jax.Array:
    """Pallas MultiLinearMap.forward:  (B, F), (B, C) -> (B, C*F)."""
    assert f.ndim == 2 and g.ndim == 2 and f.shape[0] == g.shape[0]
    B, F = f.shape
    _, C = g.shape
    out_dtype = jnp.promote_types(f.dtype, g.dtype)
    row_bytes = max(C * F * jnp.dtype(out_dtype).itemsize, 1)

    # Batch tile: big enough to amortize the ~0.35 us per-grid-step overhead,
    # small enough that 2x (double-buffered) output tile + input tiles stay
    # well under the smallest scoped-VMEM default (16 MiB on v5e).
    tb = max(1, target_tile_bytes // row_bytes)
    if max_batch_tile is not None:
        tb = min(tb, max_batch_tile)
    tb = min(tb, B)
    if tb < B:
        # Non-full-extent sublane block must be a multiple of 8.
        tb = min(max(8, (tb // 8) * 8), B)
    num_blocks = pl.cdiv(B, tb)

    return pl.pallas_call(
        _multi_linear_kernel,
        out_shape=jax.ShapeDtypeStruct((B, C * F), out_dtype),
        grid=(num_blocks,),
        in_specs=[
            pl.BlockSpec((tb, F), lambda i: (i, 0)),
            pl.BlockSpec((tb, C), lambda i: (i, 0)),
        ],
        out_specs=pl.BlockSpec((tb, C * F), lambda i: (i, 0)),
        compiler_params=pltpu.CompilerParams(
            dimension_semantics=("parallel",),
        ),
    )(f, g)


def _reference(f, g):
    # Pure-JAX reference of the torch bmm(g.unsqueeze(2), f.unsqueeze(1)).view
    B = f.shape[0]
    return jnp.einsum("bc,bf->bcf", g, f).reshape(B, -1)


if __name__ == "__main__":
    # Small deterministic inputs matching the module's shape contract.
    B, F_dim, C_dim = 2, 32, 4
    key = jax.random.PRNGKey(0)
    kf, kg = jax.random.split(key)
    f = jax.random.normal(kf, (B, F_dim), dtype=jnp.float32)
    g = jax.random.normal(kg, (B, C_dim), dtype=jnp.float32)

    out = jax.block_until_ready(multi_linear_map(f, g))
    ref = _reference(f, g)
    assert out.shape == (B, C_dim * F_dim), out.shape
    assert jnp.allclose(out, ref, atol=1e-6, rtol=1e-6), "mismatch vs reference"

    # Second check exercising the pipelined multi-block grid path (grid > 1).
    B2 = 128
    k2f, k2g = jax.random.split(jax.random.PRNGKey(1))
    f2 = jax.random.normal(k2f, (B2, F_dim), dtype=jnp.float32)
    g2 = jax.random.normal(k2g, (B2, C_dim), dtype=jnp.float32)
    out2 = jax.block_until_ready(multi_linear_map(f2, g2, max_batch_tile=32))
    ref2 = _reference(f2, g2)
    assert out2.shape == (B2, C_dim * F_dim), out2.shape
    assert jnp.allclose(out2, ref2, atol=1e-6, rtol=1e-6), "mismatch (tiled) vs reference"

    print("KERNEL_OK")
</pallas_src>

<mosaic_0001>
module attributes {stable_mosaic.version = 11 : i64} {
  func.func @_multi_linear_kernel(%arg0: i32, %arg1: memref<2x32xf32, #tpu.memory_space<vmem>>, %arg2: memref<2x4xf32, #tpu.memory_space<vmem>>, %arg3: memref<2x128xf32, #tpu.memory_space<vmem>>) attributes {dimension_semantics = [#tpu.dimension_semantics<parallel>], iteration_bounds = array<i64: 1>, scalar_prefetch = 0 : i64, scratch_operands = 0 : i64, tpu.core_type = #tpu.core_type<tc>, window_params = [{transform_indices = @transform_0, window_bounds = array<i64: 2, 32>}, {transform_indices = @transform_1, window_bounds = array<i64: 2, 4>}, {transform_indices = @transform_2, window_bounds = array<i64: 2, 128>}]} {
    %c0 = arith.constant 0 : index
    %c0_0 = arith.constant 0 : index
    %0 = vector.load %arg1[%c0, %c0_0] : memref<2x32xf32, #tpu.memory_space<vmem>>, vector<2x32xf32>
    %c0_1 = arith.constant 0 : index
    %c0_2 = arith.constant 0 : index
    %1 = vector.load %arg2[%c0_1, %c0_2] : memref<2x4xf32, #tpu.memory_space<vmem>>, vector<2x4xf32>
    %2 = vector.shape_cast %1 : vector<2x4xf32> to vector<2x4x1xf32>
    %3 = vector.shape_cast %0 : vector<2x32xf32> to vector<2x1x32xf32>
    %4 = vector.broadcast %2 : vector<2x4x1xf32> to vector<2x4x32xf32>
    %5 = vector.broadcast %3 : vector<2x1x32xf32> to vector<2x4x32xf32>
    %6 = arith.mulf %4, %5 : vector<2x4x32xf32>
    %7 = vector.shape_cast %6 : vector<2x4x32xf32> to vector<2x128xf32>
    %c0_3 = arith.constant 0 : index
    %c0_4 = arith.constant 0 : index
    %8 = vector.load %arg3[%c0_3, %c0_4] : memref<2x128xf32, #tpu.memory_space<vmem>>, vector<2x128xf32>
    tpu.vector_store %arg3[%c0_3, %c0_4], %7 {strides = array<i32>} : memref<2x128xf32, #tpu.memory_space<vmem>>, vector<2x128xf32>,
    return
  }
  func.func @transform_0(%arg0: i32) -> (i32, i32) {
    %c0_i32 = arith.constant 0 : i32
    %c0_i32_0 = arith.constant 0 : i32
    return %arg0, %c0_i32 : i32, i32
  }
  func.func @transform_1(%arg0: i32) -> (i32, i32) {
    %c0_i32 = arith.constant 0 : i32
    %c0_i32_0 = arith.constant 0 : i32
    return %arg0, %c0_i32 : i32, i32
  }
  func.func @transform_2(%arg0: i32) -> (i32, i32) {
    %c0_i32 = arith.constant 0 : i32
    %c0_i32_0 = arith.constant 0 : i32
    return %arg0, %c0_i32 : i32, i32
  }
}

</mosaic_0001>

<llo_original>
// kernel: tpu_custom_call.1
$region0: #{tpu_custom_call.1}
  #allocation0 [shape = 'u32[]', space=smem, size = 0x4, offset = 0x4, fixed_abs, tag = 'smem constant byte address 0x4 - core index']
  #allocation1 [shape = 'u32[144,128]{1,0:T(1,128)}', space=vmem, size = 0x12000, scoped, tag = 'internal scratch']
  %s0 = inlined_call_operand.hbm [shape: f32[2,32], index: 0, kind: input, shape index: {}]
  %s1 = inlined_call_operand.hbm [shape: f32[2,4], index: 1, kind: input, shape index: {}]
  %s2 = inlined_call_operand.hbm [shape: f32[2,128], index: 2, kind: output, shape index: {}]
  %s3 = sld [smem:[#allocation0]]
  $region26: #{tpu_custom_call.1} parent=0
    _
  %s5 = ssub.s32 1, %s3
  %s6 = scalar_select 0, %s5, %s3
  $region1: #{tpu_custom_call.1} parent=0
    #allocation2 [shape = 'u8[1024]{0}', space=vmem, size = 0x400, scoped, tag = 'input window, operand 0, single buffered']
    #allocation3 [shape = 's32[1]{0}', space=sflag, size = 0x4, scoped, tag = 'scoped memory for tpu_custom_call.1']
    #allocation4 [shape = 's32[1]{0}', space=sflag, size = 0x4, scoped, tag = 'scoped memory for tpu_custom_call.1']
    #allocation5 [shape = 'u8[1024]{0}', space=vmem, size = 0x400, scoped, tag = 'input window, operand 1, single buffered']
    #allocation6 [shape = 's32[1]{0}', space=sflag, size = 0x4, scoped, tag = 'scoped memory for tpu_custom_call.1']
    #allocation7 [shape = 'u8[1024]{0}', space=vmem, size = 0x400, scoped, tag = 'output window, operand 0, single buffered']
    %7 = vsyncpa [#allocation3], 0
    %8 = vsyncpa [#allocation6], 0
    %9 = vsyncpa [#allocation4], 0
    // Predicated region
    $region2: #{tpu_custom_call.1} parent=1 // pred_check
      _
    $region3: #{tpu_custom_call.1} parent=1 // pred_check_branch
      %11 = sbr.rel (0) target = $region5
    $region4: #{tpu_custom_call.1} parent=1 // pred_region
      %s13 = ssub.s32 32, 32
      %14 = vsyncadd [#allocation3], %s13
      %s16 = sshll.u32 [#allocation2], 4
      %s17 = int_to_ptr.vmem [resolvable:$true] %s16
      %19 = dma.hbm_to_vmem [thread:$0]  %s0, 32, %s17, [#allocation3]
    $region5: #{tpu_custom_call.1} parent=1 // pred_fallthru
      _
    // Predicated region
    $region6: #{tpu_custom_call.1} parent=1 // pred_check
      _
    $region7: #{tpu_custom_call.1} parent=1 // pred_check_branch
      %21 = sbr.rel (0) target = $region9
    $region8: #{tpu_custom_call.1} parent=1 // pred_region
      %s23 = ssub.s32 32, 32
      %24 = vsyncadd [#allocation6], %s23
      %s26 = sshll.u32 [#allocation5], 4
      %s27 = int_to_ptr.vmem [resolvable:$true] %s26
      %29 = dma.hbm_to_vmem [thread:$0]  %s1, 32, %s27, [#allocation6]
    $region9: #{tpu_custom_call.1} parent=1 // pred_fallthru
      _
    // Predicated region
    $region10: #{tpu_custom_call.1} parent=1 // pred_check
      _
    $region11: #{tpu_custom_call.1} parent=1 // pred_check_branch
      %31 = sbr.rel (0) target = $region13
    $region12: #{tpu_custom_call.1} parent=1 // pred_region
      %32 = dma.done [#allocation3], 32
    $region13: #{tpu_custom_call.1} parent=1 // pred_fallthru
      _
    // Predicated region
    $region14: #{tpu_custom_call.1} parent=1 // pred_check
      _
    $region15: #{tpu_custom_call.1} parent=1 // pred_check_branch
      %34 = sbr.rel (0) target = $region17
    $region16: #{tpu_custom_call.1} parent=1 // pred_region
      %35 = dma.done [#allocation6], 32
    $region17: #{tpu_custom_call.1} parent=1 // pred_fallthru
      _
    %v36 = vld [vmem:[#allocation2] sm:$0x3]
    %v37 = vld [vmem:[#allocation5] sm:$0x3]
    %v38 = vlaneseq
    %v39 = vshrl.u32 %v38, 7
    %v40 = vsub.s32 0, %v39
    %v41 = vrot.slane %v37, %v40
    %43 = vbcast.lane.b32.xlu0 %v41, 256
    %v44 = vpop.permute.xlu0 %43
    %v45 = vlaneseq
    %v46 = vshrl.u32 %v45, 7
    %v47 = vsub.s32 1, %v46
    %v48 = vrot.slane %v37, %v47
    %50 = vbcast.lane.b32.xlu0 %v48, 256
    %v51 = vpop.permute.xlu0 %50
    %v54 = vunpack.c.l.s4 1966171168
    %v55 = vunpack.c.0.s8 %v54
    %v56 = vlaneseq
    %v57 = vshrl.u32 %v56, 7
    %v58 = vsub.s32 %v55, %v57
    %v59 = vrot.slane %v36, %v58
    %v60 = vcombine.high %v59, %v59
    %v62 = vunpack.c.l.s4 1966171168
    %v63 = vunpack.c.0.s8 %v62
    %v64 = vlaneseq
    %v65 = vshrl.u32 %v64, 7
    %v66 = vsub.s32 %v63, %v65
    %v67 = vrot.slane %v59, %v66
    %v69 = vunpack.c.l.s4 1966171168
    %v70 = vunpack.c.0.s8 %v69
    %v71 = vlaneseq
    %v72 = vshrl.u32 %v71, 7
    %v73 = vsub.s32 %v70, %v72
    %v74 = vrot.slane %v60, %v73
    %v75 = vlaneseq
    %v76 = vshrl.u32 %v75, 7
    %v77 = vsub.s32 0, %v76
    %v78 = vrot.slane %v67, %v77
    %v79 = vlaneseq
    %v80 = vshrl.u32 %v79, 7
    %v81 = vsub.s32 0, %v80
    %v82 = vrot.slane %v74, %v81
    %v85 = vmul.f32 %v44, %v78
    %v87 = vunpack.c.l.s4 1983009808
    %v88 = vunpack.c.0.s8 %v87
    %v89 = vlaneseq
    %v90 = vshrl.u32 %v89, 7
    %v91 = vsub.s32 %v88, %v90
    %v92 = vrot.slane %v85, %v91
    %v93 = vmul.f32 %v51, %v82
    %v95 = vunpack.c.l.s4 1983009808
    %v96 = vunpack.c.0.s8 %v95
    %v97 = vlaneseq
    %v98 = vshrl.u32 %v97, 7
    %v99 = vsub.s32 %v96, %v98
    %v100 = vrot.slane %v93, %v99
    %v101 = vcombine.low %v92, %v100
    %v102 = vcombine.high %v92, %v100
    %v104 = vunpack.c.l.s4 1934713408
    %v105 = vunpack.c.0.s8 %v104
    %v106 = vlaneseq
    %v107 = vshrl.u32 %v106, 7
    %v108 = vsub.s32 %v105, %v107
    %v109 = vrot.slane %v101, %v108
    %v111 = vunpack.c.l.s4 1934713408
    %v112 = vunpack.c.0.s8 %v111
    %v113 = vlaneseq
    %v114 = vshrl.u32 %v113, 7
    %v115 = vsub.s32 %v112, %v114
    %v116 = vrot.slane %v102, %v115
    %v117 = vcombine.high %v109, 0.0
    %v118 = vcombine.high %v116, 0.0
    %120 = vrot.lane.b32.xlu0 %v117, 32
    %v121 = vpop.permute.xlu0 %120
    %124 = vrot.lane.b32.xlu0 %v116, 64
    %v125 = vpop.permute.xlu0 %124
    %128 = vrot.lane.b32.xlu0 %v118, 96
    %v129 = vpop.permute.xlu0 %128
    %vm131 = vcmask 261120
    %v132 = vsel %vm131, %v109, %v121
    %vm133 = vcmask 523264
    %v134 = vsel %vm133, %v132, %v125
    %vm135 = vcmask 785408
    %v136 = vsel %vm135, %v134, %v129
    %137 = vst [vmem:[#allocation7] sm:$0x3] %v136
    // Predicated region
    $region18: #{tpu_custom_call.1} parent=1 // pred_check
      _
    $region19: #{tpu_custom_call.1} parent=1 // pred_check_branch
      %139 = sbr.rel (0) target = $region21
    $region20: #{tpu_custom_call.1} parent=1 // pred_region
      %s141 = ssub.s32 32, 32
      %142 = vsyncadd [#allocation4], %s141
      %s144 = sshll.u32 [#allocation7], 4
      %s145 = int_to_ptr.vmem [resolvable:$true] %s144
      %147 = dma.vmem_to_hbm [thread:$0]  %s145, 32, %s2, [#allocation4]
    $region21: #{tpu_custom_call.1} parent=1 // pred_fallthru
      _
    // Predicated region
    $region22: #{tpu_custom_call.1} parent=1 // pred_check
      _
    $region23: #{tpu_custom_call.1} parent=1 // pred_check_branch
      %149 = sbr.rel (0) target = $region25
    $region24: #{tpu_custom_call.1} parent=1 // pred_region
      %150 = dma.done [#allocation4], 32
    $region25: #{tpu_custom_call.1} parent=1 // pred_fallthru
      _
    %151 = vsyncpa [#allocation3], 1
    %152 = vsyncpa [#allocation6], 1
    %153 = vsyncpa [#allocation4], 1

</llo_original>
